<compile_context>
chip_gen: v6e
topology: v6e:2x2x1
jax: 0.10.0
libtpu: 0.0.40
codegen_flags: <defaults>
</compile_context>

<pallas_src>
import jax
import jax.numpy as jnp
from jax.experimental import pallas as pl
from jax.experimental.pallas import tpu as pltpu


def _round_up(x, m):
    return ((x + m - 1) // m) * m


def _cdiv(a, b):
    return (a + b - 1) // b


def actor_kernel(x_ref, w1t_ref, b1_ref, w2t_ref, b2_ref, w3d_ref, b3d_ref, o_ref):
    # x_ref:   (4, TB)    f32   state, batch on the lane axis
    # w1t_ref: (128, 4)   f32
    # b1_ref:  (128, 1)   f32
    # w2t_ref: (128, 128) bf16
    # b2_ref:  (128, 1)   f32
    # w3d_ref: (8, 128)   bf16  row 0 = w3[:,1] - w3[:,0], rows 1..7 zero
    # b3d_ref: (1, 1)     f32
    # o_ref:   (2, TB)    f32   row 0 = p0, row 1 = p1
    x = x_ref[...]
    w1t = w1t_ref[...]

    # ---- Layer 1 (K=4): four outer-product FMAs on the VPU in f32 ----
    acc = w1t[:, 0:1] * x[0:1, :]
    for k in range(1, 4):                          # static, fully unrolled
        acc = acc + w1t[:, k:k + 1] * x[k:k + 1, :]
    h1 = jnp.maximum(acc + b1_ref[...], 0.0)       # (128, TB) f32

    # ---- Layer 2 (128x128): bf16 operands, f32 accumulation on the MXU ----
    h2 = jnp.dot(w2t_ref[...], h1.astype(jnp.bfloat16),
                 preferred_element_type=jnp.float32)
    h2 = jnp.maximum(h2 + b2_ref[...], 0.0)        # (128, TB) f32

    # ---- Folded 2-class head: d = l1 - l0 via an 8-row MXU mat-vec ----
    d8 = jnp.dot(w3d_ref[...], h2.astype(jnp.bfloat16),
                 preferred_element_type=jnp.float32)         # (8, TB)
    d = d8[0:1, :] + b3d_ref[...]                            # (1, TB)

    # softmax over 2 classes == sigmoid of the logit difference.
    p1 = pl.reciprocal(1.0 + jnp.exp(-d), approx=True)       # (1, TB)
    o_ref[1:2, :] = p1                 # direct slice stores, no concatenate
    o_ref[0:1, :] = 1.0 - p1


def prepare_params(params):
    """One-time (hoisted) derivation of the kernel-side weight layout."""
    w1, b1, w2, b2, w3, b3 = params
    w1t = jnp.asarray(w1.T, jnp.float32)                     # (128, 4)
    b1c = jnp.asarray(b1.reshape(-1, 1), jnp.float32)        # (128, 1)
    w2t = jnp.asarray(w2.T, jnp.bfloat16)                    # (128, 128)
    b2c = jnp.asarray(b2.reshape(-1, 1), jnp.float32)        # (128, 1)
    # Fold the 2-class output layer into one logit-difference row, padded to 8
    # sublanes for an aligned MXU mat-vec:
    #   softmax([l0, l1]) = [1 - sigmoid(d), sigmoid(d)],  d = l1 - l0.
    w3d_row = (w3[:, 1] - w3[:, 0]).reshape(1, -1)           # (1, 128)
    w3d8 = jnp.zeros((8, w3.shape[0]), jnp.float32).at[0:1, :].set(w3d_row)
    w3d8 = w3d8.astype(jnp.bfloat16)                         # (8, 128)
    b3d = (b3[:, 1:2] - b3[:, 0:1]).astype(jnp.float32)      # (1, 1)
    return (w1t, b1c, w2t, b2c, w3d8, b3d)


def _choose_tile(B):
    """Batch tile (lane axis) + padded batch.  TB is a multiple of 128 (lane-
    dense, satisfies the (8,128) rule), capped at 2048 (overhead-bound kernel),
    and chosen so the grid has >= 2 steps once the padded batch reaches 256
    (both v7x TensorCores get work; harmless on single-TC v5e/v6e)."""
    TB_CAP = 2048
    bp0 = _round_up(max(B, 1), 128)
    if bp0 <= 128:
        tb = 128
    else:
        tb = min(TB_CAP, _round_up(_cdiv(bp0, 2), 128))
    bp = _round_up(bp0, tb)
    return tb, bp


@jax.jit
def actor_forward(state, prepared):
    """state: (B, 4) float32 -> probs: (B, 2) float32."""
    w1t, b1c, w2t, b2c, w3d8, b3d = prepared
    B = state.shape[0]
    TB, Bp = _choose_tile(B)

    # Batch-on-lanes layout: pad the batch, then transpose to (4, Bp).
    xT = jnp.pad(state.astype(jnp.float32), ((0, Bp - B), (0, 0))).T

    grid = (Bp // TB,)
    x_spec = pl.BlockSpec((4, TB), lambda i: (0, i))
    out_spec = pl.BlockSpec((2, TB), lambda i: (0, i))

    def const(a):  # weights stay resident: constant index_map, full-array block
        return pl.BlockSpec(a.shape, lambda i: (0,) * a.ndim)

    outT = pl.pallas_call(
        actor_kernel,
        out_shape=jax.ShapeDtypeStruct((2, Bp), jnp.float32),
        grid=grid,
        in_specs=[x_spec, const(w1t), const(b1c), const(w2t), const(b2c),
                  const(w3d8), const(b3d)],
        out_specs=out_spec,
        compiler_params=pltpu.CompilerParams(
            dimension_semantics=("parallel",)),
    )(xT, w1t, b1c, w2t, b2c, w3d8, b3d)

    return outT.T[:B]


def init_params(key):
    """Deterministic init mimicking PyTorch Linear default (uniform +/- 1/sqrt(fan_in)).
    Weights stored as (in, out) so the reference computes x @ W + b."""
    dims = [(4, 128), (128, 128), (128, 2)]
    params = []
    for fan_in, fan_out in dims:
        kw, kb, key = jax.random.split(key, 3)
        bound = 1.0 / jnp.sqrt(fan_in)
        w = jax.random.uniform(kw, (fan_in, fan_out), jnp.float32, -bound, bound)
        b = jax.random.uniform(kb, (1, fan_out), jnp.float32, -bound, bound)
        params.extend([w, b])
    return tuple(params)


def reference_forward(state, params):
    w1, b1, w2, b2, w3, b3 = params
    h1 = jnp.maximum(state @ w1 + b1, 0.0)
    h2 = jnp.maximum(h1 @ w2 + b2, 0.0)
    logits = h2 @ w3 + b3
    return jax.nn.softmax(logits, axis=-1)


if __name__ == "__main__":
    key = jax.random.PRNGKey(0)
    k_state, k_state2, k_params = jax.random.split(key, 3)
    params = init_params(k_params)
    prepared = prepare_params(params)

    # Tolerance loosened vs f32 reference: the dominant matmuls use bf16
    # operands (f32 accumulation) and p1 uses the approx EUP reciprocal.
    ATOL = 2e-2

    # Small batch: single grid step (padded to one 128-wide lane tile).
    B = 8
    state = jax.random.normal(k_state, (B, 4), dtype=jnp.float32)
    probs = jax.block_until_ready(actor_forward(state, prepared))
    ref = reference_forward(state, params)
    assert probs.shape == (B, 2)
    assert jnp.allclose(probs, ref, atol=ATOL)
    assert jnp.allclose(jnp.sum(probs, axis=-1), 1.0, atol=1e-5)

    # Larger batch: exercises the 2-step grid (megacore split) + tail padding.
    B2 = 600
    state2 = jax.random.normal(k_state2, (B2, 4), dtype=jnp.float32)
    probs2 = jax.block_until_ready(actor_forward(state2, prepared))
    ref2 = reference_forward(state2, params)
    assert probs2.shape == (B2, 2)
    assert jnp.allclose(probs2, ref2, atol=ATOL)
    assert jnp.allclose(jnp.sum(probs2, axis=-1), 1.0, atol=1e-5)

    print("KERNEL_OK")
</pallas_src>

<mosaic_0001>
module attributes {stable_mosaic.version = 11 : i64} {
  func.func @actor_kernel(%arg0: i32, %arg1: memref<4x128xf32, #tpu.memory_space<vmem>>, %arg2: memref<128x4xf32, #tpu.memory_space<vmem>>, %arg3: memref<128x1xf32, #tpu.memory_space<vmem>>, %arg4: memref<128x128xbf16, #tpu.memory_space<vmem>>, %arg5: memref<128x1xf32, #tpu.memory_space<vmem>>, %arg6: memref<8x128xbf16, #tpu.memory_space<vmem>>, %arg7: memref<1x1xf32, #tpu.memory_space<vmem>>, %arg8: memref<2x128xf32, #tpu.memory_space<vmem>>) attributes {dimension_semantics = [#tpu.dimension_semantics<parallel>], iteration_bounds = array<i64: 1>, scalar_prefetch = 0 : i64, scratch_operands = 0 : i64, tpu.core_type = #tpu.core_type<tc>, window_params = [{transform_indices = @transform_0, window_bounds = array<i64: 4, 128>}, {pipeline_mode = #tpu.pipeline_mode<synchronous>, transform_indices = @transform_1, window_bounds = array<i64: 128, 4>}, {pipeline_mode = #tpu.pipeline_mode<synchronous>, transform_indices = @transform_2, window_bounds = array<i64: 128, 1>}, {pipeline_mode = #tpu.pipeline_mode<synchronous>, transform_indices = @transform_3, window_bounds = array<i64: 128, 128>}, {pipeline_mode = #tpu.pipeline_mode<synchronous>, transform_indices = @transform_4, window_bounds = array<i64: 128, 1>}, {pipeline_mode = #tpu.pipeline_mode<synchronous>, transform_indices = @transform_5, window_bounds = array<i64: 8, 128>}, {pipeline_mode = #tpu.pipeline_mode<synchronous>, transform_indices = @transform_6, window_bounds = array<i64: 1, 1>}, {transform_indices = @transform_7, window_bounds = array<i64: 2, 128>}]} {
    %c0 = arith.constant 0 : index
    %c0_0 = arith.constant 0 : index
    %0 = vector.load %arg1[%c0, %c0_0] : memref<4x128xf32, #tpu.memory_space<vmem>>, vector<4x128xf32>
    %c0_1 = arith.constant 0 : index
    %c0_2 = arith.constant 0 : index
    %1 = vector.load %arg2[%c0_1, %c0_2] : memref<128x4xf32, #tpu.memory_space<vmem>>, vector<128x4xf32>
    %2 = vector.extract_strided_slice %1 {offsets = [0, 0], sizes = [128, 1], strides = [1, 1]} : vector<128x4xf32> to vector<128x1xf32>
    %3 = vector.extract_strided_slice %0 {offsets = [0, 0], sizes = [1, 128], strides = [1, 1]} : vector<4x128xf32> to vector<1x128xf32>
    %4 = vector.broadcast %2 : vector<128x1xf32> to vector<128x128xf32>
    %5 = vector.broadcast %3 : vector<1x128xf32> to vector<128x128xf32>
    %6 = arith.mulf %4, %5 : vector<128x128xf32>
    %7 = vector.extract_strided_slice %1 {offsets = [0, 1], sizes = [128, 1], strides = [1, 1]} : vector<128x4xf32> to vector<128x1xf32>
    %8 = vector.extract_strided_slice %0 {offsets = [1, 0], sizes = [1, 128], strides = [1, 1]} : vector<4x128xf32> to vector<1x128xf32>
    %9 = vector.broadcast %7 : vector<128x1xf32> to vector<128x128xf32>
    %10 = vector.broadcast %8 : vector<1x128xf32> to vector<128x128xf32>
    %11 = arith.mulf %9, %10 : vector<128x128xf32>
    %12 = arith.addf %6, %11 : vector<128x128xf32>
    %13 = vector.extract_strided_slice %1 {offsets = [0, 2], sizes = [128, 1], strides = [1, 1]} : vector<128x4xf32> to vector<128x1xf32>
    %14 = vector.extract_strided_slice %0 {offsets = [2, 0], sizes = [1, 128], strides = [1, 1]} : vector<4x128xf32> to vector<1x128xf32>
    %15 = vector.broadcast %13 : vector<128x1xf32> to vector<128x128xf32>
    %16 = vector.broadcast %14 : vector<1x128xf32> to vector<128x128xf32>
    %17 = arith.mulf %15, %16 : vector<128x128xf32>
    %18 = arith.addf %12, %17 : vector<128x128xf32>
    %19 = vector.extract_strided_slice %1 {offsets = [0, 3], sizes = [128, 1], strides = [1, 1]} : vector<128x4xf32> to vector<128x1xf32>
    %20 = vector.extract_strided_slice %0 {offsets = [3, 0], sizes = [1, 128], strides = [1, 1]} : vector<4x128xf32> to vector<1x128xf32>
    %21 = vector.broadcast %19 : vector<128x1xf32> to vector<128x128xf32>
    %22 = vector.broadcast %20 : vector<1x128xf32> to vector<128x128xf32>
    %23 = arith.mulf %21, %22 : vector<128x128xf32>
    %24 = arith.addf %18, %23 : vector<128x128xf32>
    %c0_3 = arith.constant 0 : index
    %c0_4 = arith.constant 0 : index
    %25 = vector.load %arg3[%c0_3, %c0_4] : memref<128x1xf32, #tpu.memory_space<vmem>>, vector<128x1xf32>
    %26 = vector.broadcast %25 : vector<128x1xf32> to vector<128x128xf32>
    %27 = arith.addf %24, %26 : vector<128x128xf32>
    %cst = arith.constant 0.000000e+00 : f32
    %28 = vector.broadcast %cst : f32 to vector<128x128xf32>
    %29 = arith.maximumf %27, %28 : vector<128x128xf32>
    %c0_5 = arith.constant 0 : index
    %c0_6 = arith.constant 0 : index
    %30 = vector.load %arg4[%c0_5, %c0_6] : memref<128x128xbf16, #tpu.memory_space<vmem>>, vector<128x128xbf16>
    %31 = arith.truncf %29 : vector<128x128xf32> to vector<128x128xbf16>
    %cst_7 = arith.constant dense<0.000000e+00> : vector<128x128xf32>
    %32 = tpu.matmul %30, %31, %cst_7 {dimension_numbers = #tpu.dot_dimension_numbers<[1], [0], [0], [1], [0, 0, 1, 1], [], []>} : vector<128x128xbf16>, vector<128x128xbf16>, vector<128x128xf32> -> vector<128x128xf32>
    %c0_8 = arith.constant 0 : index
    %c0_9 = arith.constant 0 : index
    %33 = vector.load %arg5[%c0_8, %c0_9] : memref<128x1xf32, #tpu.memory_space<vmem>>, vector<128x1xf32>
    %34 = vector.broadcast %33 : vector<128x1xf32> to vector<128x128xf32>
    %35 = arith.addf %32, %34 : vector<128x128xf32>
    %cst_10 = arith.constant 0.000000e+00 : f32
    %36 = vector.broadcast %cst_10 : f32 to vector<128x128xf32>
    %37 = arith.maximumf %35, %36 : vector<128x128xf32>
    %c0_11 = arith.constant 0 : index
    %c0_12 = arith.constant 0 : index
    %38 = vector.load %arg6[%c0_11, %c0_12] : memref<8x128xbf16, #tpu.memory_space<vmem>>, vector<8x128xbf16>
    %39 = arith.truncf %37 : vector<128x128xf32> to vector<128x128xbf16>
    %cst_13 = arith.constant dense<0.000000e+00> : vector<8x128xf32>
    %40 = tpu.matmul %38, %39, %cst_13 {dimension_numbers = #tpu.dot_dimension_numbers<[1], [0], [0], [1], [0, 0, 1, 1], [], []>} : vector<8x128xbf16>, vector<128x128xbf16>, vector<8x128xf32> -> vector<8x128xf32>
    %41 = vector.extract_strided_slice %40 {offsets = [0, 0], sizes = [1, 128], strides = [1, 1]} : vector<8x128xf32> to vector<1x128xf32>
    %c0_14 = arith.constant 0 : index
    %c0_15 = arith.constant 0 : index
    %42 = vector.load %arg7[%c0_14, %c0_15] : memref<1x1xf32, #tpu.memory_space<vmem>>, vector<1x1xf32>
    %43 = vector.broadcast %42 : vector<1x1xf32> to vector<1x128xf32>
    %44 = arith.addf %41, %43 : vector<1x128xf32>
    %cst_16 = arith.constant 0.000000e+00 : f32
    %45 = vector.broadcast %cst_16 : f32 to vector<1x128xf32>
    %46 = arith.subf %45, %44 : vector<1x128xf32>
    %47 = math.exp %46 : vector<1x128xf32>
    %cst_17 = arith.constant 1.000000e+00 : f32
    %48 = vector.broadcast %cst_17 : f32 to vector<1x128xf32>
    %49 = arith.addf %48, %47 : vector<1x128xf32>
    %50 = tpu.reciprocal %49 {approx = true} : vector<1x128xf32> -> vector<1x128xf32>
    %c1 = arith.constant 1 : index
    %c0_18 = arith.constant 0 : index
    %51 = vector.load %arg8[%c1, %c0_18] : memref<2x128xf32, #tpu.memory_space<vmem>>, vector<1x128xf32>
    tpu.vector_store %arg8[%c1, %c0_18], %50 {strides = array<i32>} : memref<2x128xf32, #tpu.memory_space<vmem>>, vector<1x128xf32>,
    %cst_19 = arith.constant 1.000000e+00 : f32
    %52 = vector.broadcast %cst_19 : f32 to vector<1x128xf32>
    %53 = arith.subf %52, %50 : vector<1x128xf32>
    %c0_20 = arith.constant 0 : index
    %c0_21 = arith.constant 0 : index
    %54 = vector.load %arg8[%c0_20, %c0_21] : memref<2x128xf32, #tpu.memory_space<vmem>>, vector<1x128xf32>
    tpu.vector_store %arg8[%c0_20, %c0_21], %53 {strides = array<i32>} : memref<2x128xf32, #tpu.memory_space<vmem>>, vector<1x128xf32>,
    return
  }
  func.func @transform_0(%arg0: i32) -> (i32, i32) {
    %c0_i32 = arith.constant 0 : i32
    %c0_i32_0 = arith.constant 0 : i32
    return %c0_i32, %arg0 : i32, i32
  }
  func.func @transform_1(%arg0: i32) -> (i32, i32) {
    %c0_i32 = arith.constant 0 : i32
    %c0_i32_0 = arith.constant 0 : i32
    %c0_i32_1 = arith.constant 0 : i32
    return %c0_i32, %c0_i32_0 : i32, i32
  }
  func.func @transform_2(%arg0: i32) -> (i32, i32) {
    %c0_i32 = arith.constant 0 : i32
    %c0_i32_0 = arith.constant 0 : i32
    %c0_i32_1 = arith.constant 0 : i32
    return %c0_i32, %c0_i32_0 : i32, i32
  }
  func.func @transform_3(%arg0: i32) -> (i32, i32) {
    %c0_i32 = arith.constant 0 : i32
    %c0_i32_0 = arith.constant 0 : i32
    %c0_i32_1 = arith.constant 0 : i32
    return %c0_i32, %c0_i32_0 : i32, i32
  }
  func.func @transform_4(%arg0: i32) -> (i32, i32) {
    %c0_i32 = arith.constant 0 : i32
    %c0_i32_0 = arith.constant 0 : i32
    %c0_i32_1 = arith.constant 0 : i32
    return %c0_i32, %c0_i32_0 : i32, i32
  }
  func.func @transform_5(%arg0: i32) -> (i32, i32) {
    %c0_i32 = arith.constant 0 : i32
    %c0_i32_0 = arith.constant 0 : i32
    %c0_i32_1 = arith.constant 0 : i32
    return %c0_i32, %c0_i32_0 : i32, i32
  }
  func.func @transform_6(%arg0: i32) -> (i32, i32) {
    %c0_i32 = arith.constant 0 : i32
    %c0_i32_0 = arith.constant 0 : i32
    %c0_i32_1 = arith.constant 0 : i32
    return %c0_i32, %c0_i32_0 : i32, i32
  }
  func.func @transform_7(%arg0: i32) -> (i32, i32) {
    %c0_i32 = arith.constant 0 : i32
    %c0_i32_0 = arith.constant 0 : i32
    return %c0_i32, %arg0 : i32, i32
  }
}

</mosaic_0001>

<llo_original>
// kernel: actor_forward.1
$region0: #{actor_forward.1}
  #allocation0 [shape = 'u32[]', space=smem, size = 0x4, offset = 0x4, fixed_abs, tag = 'smem constant byte address 0x4 - core index']
  #allocation1 [shape = 'u32[144,128]{1,0:T(1,128)}', space=vmem, size = 0x12000, scoped, tag = 'internal scratch']
  #allocation2 [shape = 'f32[1,1]{1,0:T(1,128)S(1)}', space=vmem, size = 0x200, scoped, tag = 'scoped memory for actor_forward.1']
  %s0 = inlined_call_operand.vmem [shape: f32[4,128], index: 0, kind: input, shape index: {}]
  %s1 = inlined_call_operand.vmem [shape: f32[128,4], index: 1, kind: input, shape index: {}]
  %s2 = inlined_call_operand.vmem [shape: f32[128,1], index: 2, kind: input, shape index: {}]
  %s3 = inlined_call_operand.vmem [shape: bf16[128,128], index: 3, kind: input, shape index: {}]
  %s4 = inlined_call_operand.vmem [shape: f32[128,1], index: 4, kind: input, shape index: {}]
  %s5 = inlined_call_operand.vmem [shape: bf16[8,128], index: 5, kind: input, shape index: {}]
  %s6 = inlined_call_operand.<no memory space> [shape: f32[1,1], index: 6, kind: input, shape index: {}]
  %s7 = inlined_call_operand.hbm [shape: f32[2,128], index: 7, kind: output, shape index: {}]
  %s8 = sld [smem:[#allocation0]]
  $region38: #{actor_forward.1} parent=0
    _
  %s10 = ssub.s32 1, %s8
  %s11 = scalar_select 0, %s10, %s8
  %v12 = vstv %s6
  %13 = vst [vmem:[#allocation2] sm:$0x1] %v12
  $region1: #{actor_forward.1} parent=0
    #allocation3 [shape = 'u8[1024]{0}', space=vmem, size = 0x400, scoped, tag = 'output window, operand 0, single buffered']
    #allocation4 [shape = 's32[1]{0}', space=sflag, size = 0x4, scoped, tag = 'scoped memory for actor_forward.1']
    %14 = vsyncpa [#allocation4], 0
    // Predicated region
    $region2: #{actor_forward.1} parent=1 // pred_check
      _
    $region3: #{actor_forward.1} parent=1 // pred_check_branch
      %16 = sbr.rel (0) target = $region5
    $region4: #{actor_forward.1} parent=1 // pred_region
      _
    $region5: #{actor_forward.1} parent=1 // pred_fallthru
      _
    // Predicated region
    $region6: #{actor_forward.1} parent=1 // pred_check
      _
    $region7: #{actor_forward.1} parent=1 // pred_check_branch
      %18 = sbr.rel (0) target = $region9
    $region8: #{actor_forward.1} parent=1 // pred_region
      _
    $region9: #{actor_forward.1} parent=1 // pred_fallthru
      _
    // Predicated region
    $region10: #{actor_forward.1} parent=1 // pred_check
      _
    $region11: #{actor_forward.1} parent=1 // pred_check_branch
      %20 = sbr.rel (0) target = $region13
    $region12: #{actor_forward.1} parent=1 // pred_region
      _
    $region13: #{actor_forward.1} parent=1 // pred_fallthru
      _
    // Predicated region
    $region14: #{actor_forward.1} parent=1 // pred_check
      _
    $region15: #{actor_forward.1} parent=1 // pred_check_branch
      %22 = sbr.rel (0) target = $region17
    $region16: #{actor_forward.1} parent=1 // pred_region
      _
    $region17: #{actor_forward.1} parent=1 // pred_fallthru
      _
    // Predicated region
    $region18: #{actor_forward.1} parent=1 // pred_check
      _
    $region19: #{actor_forward.1} parent=1 // pred_check_branch
      %24 = sbr.rel (0) target = $region21
    $region20: #{actor_forward.1} parent=1 // pred_region
      _
    $region21: #{actor_forward.1} parent=1 // pred_fallthru
      _
    // Predicated region
    $region22: #{actor_forward.1} parent=1 // pred_check
      _
    $region23: #{actor_forward.1} parent=1 // pred_check_branch
      %26 = sbr.rel (0) target = $region25
    $region24: #{actor_forward.1} parent=1 // pred_region
      _
    $region25: #{actor_forward.1} parent=1 // pred_fallthru
      _
    // Predicated region
    $region26: #{actor_forward.1} parent=1 // pred_check
      _
    $region27: #{actor_forward.1} parent=1 // pred_check_branch
      %28 = sbr.rel (0) target = $region29
    $region28: #{actor_forward.1} parent=1 // pred_region
      _
    $region29: #{actor_forward.1} parent=1 // pred_fallthru
      _
    %v30 = vld [vmem:[%s0] sm:$0xf]
    %v31 = vld [vmem:[%s1] sm:$0xff]
    %v32 = vld [vmem:[%s1 + $0x8] sm:$0xff]
    %v33 = vld [vmem:[%s1 + $0x10] sm:$0xff]
    %v34 = vld [vmem:[%s1 + $0x18] sm:$0xff]
    %v35 = vld [vmem:[%s1 + $0x20] sm:$0xff]
    %v36 = vld [vmem:[%s1 + $0x28] sm:$0xff]
    %v37 = vld [vmem:[%s1 + $0x30] sm:$0xff]
    %v38 = vld [vmem:[%s1 + $0x38] sm:$0xff]
    %v39 = vld [vmem:[%s1 + $0x40] sm:$0xff]
    %v40 = vld [vmem:[%s1 + $0x48] sm:$0xff]
    %v41 = vld [vmem:[%s1 + $0x50] sm:$0xff]
    %v42 = vld [vmem:[%s1 + $0x58] sm:$0xff]
    %v43 = vld [vmem:[%s1 + $0x60] sm:$0xff]
    %v44 = vld [vmem:[%s1 + $0x68] sm:$0xff]
    %v45 = vld [vmem:[%s1 + $0x70] sm:$0xff]
    %v46 = vld [vmem:[%s1 + $0x78] sm:$0xff]
    %48 = vset.pattern.permute.xlu0 0
    %49 = vperm.xlu0 %48, %v31
    %v50 = vpop.permute.xlu0 %49
    %53 = vset.pattern.permute.xlu0 0
    %54 = vperm.xlu0 %53, %v32
    %v55 = vpop.permute.xlu0 %54
    %58 = vset.pattern.permute.xlu0 0
    %59 = vperm.xlu0 %58, %v33
    %v60 = vpop.permute.xlu0 %59
    %63 = vset.pattern.permute.xlu0 0
    %64 = vperm.xlu0 %63, %v34
    %v65 = vpop.permute.xlu0 %64
    %68 = vset.pattern.permute.xlu0 0
    %69 = vperm.xlu0 %68, %v35
    %v70 = vpop.permute.xlu0 %69
    %73 = vset.pattern.permute.xlu0 0
    %74 = vperm.xlu0 %73, %v36
    %v75 = vpop.permute.xlu0 %74
    %78 = vset.pattern.permute.xlu0 0
    %79 = vperm.xlu0 %78, %v37
    %v80 = vpop.permute.xlu0 %79
    %83 = vset.pattern.permute.xlu0 0
    %84 = vperm.xlu0 %83, %v38
    %v85 = vpop.permute.xlu0 %84
    %88 = vset.pattern.permute.xlu0 0
    %89 = vperm.xlu0 %88, %v39
    %v90 = vpop.permute.xlu0 %89
    %93 = vset.pattern.permute.xlu0 0
    %94 = vperm.xlu0 %93, %v40
    %v95 = vpop.permute.xlu0 %94
    %98 = vset.pattern.permute.xlu0 0
    %99 = vperm.xlu0 %98, %v41
    %v100 = vpop.permute.xlu0 %99
    %103 = vset.pattern.permute.xlu0 0
    %104 = vperm.xlu0 %103, %v42
    %v105 = vpop.permute.xlu0 %104
    %108 = vset.pattern.permute.xlu0 0
    %109 = vperm.xlu0 %108, %v43
    %v110 = vpop.permute.xlu0 %109
    %113 = vset.pattern.permute.xlu0 0
    %114 = vperm.xlu0 %113, %v44
    %v115 = vpop.permute.xlu0 %114
    %118 = vset.pattern.permute.xlu0 0
    %119 = vperm.xlu0 %118, %v45
    %v120 = vpop.permute.xlu0 %119
    %123 = vset.pattern.permute.xlu0 0
    %124 = vperm.xlu0 %123, %v46
    %v125 = vpop.permute.xlu0 %124
    %v127 = vlaneseq
    %v128 = vshrl.u32 %v127, 7
    %v129 = vsub.s32 0, %v128
    %v130 = vrot.slane %v30, %v129
    %v131 = vmul.f32 %v50, %v130
    %v132 = vmul.f32 %v55, %v130
    %v133 = vmul.f32 %v60, %v130
    %v134 = vmul.f32 %v65, %v130
    %v135 = vmul.f32 %v70, %v130
    %v136 = vmul.f32 %v75, %v130
    %v137 = vmul.f32 %v80, %v130
    %v138 = vmul.f32 %v85, %v130
    %v139 = vmul.f32 %v90, %v130
    %v140 = vmul.f32 %v95, %v130
    %v141 = vmul.f32 %v100, %v130
    %v142 = vmul.f32 %v105, %v130
    %v143 = vmul.f32 %v110, %v130
    %v144 = vmul.f32 %v115, %v130
    %v145 = vmul.f32 %v120, %v130
    %v146 = vmul.f32 %v125, %v130
    %147 = vset.pattern.permute.xlu0 1
    %148 = vperm.xlu0 %147, %v31
    %v149 = vpop.permute.xlu0 %148
    %151 = vset.pattern.permute.xlu0 1
    %152 = vperm.xlu0 %151, %v32
    %v153 = vpop.permute.xlu0 %152
    %155 = vset.pattern.permute.xlu0 1
    %156 = vperm.xlu0 %155, %v33
    %v157 = vpop.permute.xlu0 %156
    %159 = vset.pattern.permute.xlu0 1
    %160 = vperm.xlu0 %159, %v34
    %v161 = vpop.permute.xlu0 %160
    %163 = vset.pattern.permute.xlu0 1
    %164 = vperm.xlu0 %163, %v35
    %v165 = vpop.permute.xlu0 %164
    %167 = vset.pattern.permute.xlu0 1
    %168 = vperm.xlu0 %167, %v36
    %v169 = vpop.permute.xlu0 %168
    %171 = vset.pattern.permute.xlu0 1
    %172 = vperm.xlu0 %171, %v37
    %v173 = vpop.permute.xlu0 %172
    %175 = vset.pattern.permute.xlu0 1
    %176 = vperm.xlu0 %175, %v38
    %v177 = vpop.permute.xlu0 %176
    %179 = vset.pattern.permute.xlu0 1
    %180 = vperm.xlu0 %179, %v39
    %v181 = vpop.permute.xlu0 %180
    %183 = vset.pattern.permute.xlu0 1
    %184 = vperm.xlu0 %183, %v40
    %v185 = vpop.permute.xlu0 %184
    %187 = vset.pattern.permute.xlu0 1
    %188 = vperm.xlu0 %187, %v41
    %v189 = vpop.permute.xlu0 %188
    %191 = vset.pattern.permute.xlu0 1
    %192 = vperm.xlu0 %191, %v42
    %v193 = vpop.permute.xlu0 %192
    %195 = vset.pattern.permute.xlu0 1
    %196 = vperm.xlu0 %195, %v43
    %v197 = vpop.permute.xlu0 %196
    %199 = vset.pattern.permute.xlu0 1
    %200 = vperm.xlu0 %199, %v44
    %v201 = vpop.permute.xlu0 %200
    %203 = vset.pattern.permute.xlu0 1
    %204 = vperm.xlu0 %203, %v45
    %v205 = vpop.permute.xlu0 %204
    %207 = vset.pattern.permute.xlu0 1
    %208 = vperm.xlu0 %207, %v46
    %v209 = vpop.permute.xlu0 %208
    %v211 = vlaneseq
    %v212 = vshrl.u32 %v211, 7
    %v213 = vsub.s32 1, %v212
    %v214 = vrot.slane %v30, %v213
    %v215 = vmul.f32 %v149, %v214
    %v216 = vmul.f32 %v153, %v214
    %v217 = vmul.f32 %v157, %v214
    %v218 = vmul.f32 %v161, %v214
    %v219 = vmul.f32 %v165, %v214
    %v220 = vmul.f32 %v169, %v214
    %v221 = vmul.f32 %v173, %v214
    %v222 = vmul.f32 %v177, %v214
    %v223 = vmul.f32 %v181, %v214
    %v224 = vmul.f32 %v185, %v214
    %v225 = vmul.f32 %v189, %v214
    %v226 = vmul.f32 %v193, %v214
    %v227 = vmul.f32 %v197, %v214
    %v228 = vmul.f32 %v201, %v214
    %v229 = vmul.f32 %v205, %v214
    %v230 = vmul.f32 %v209, %v214
    %v231 = vadd.f32 %v131, %v215
    %v232 = vadd.f32 %v132, %v216
    %v233 = vadd.f32 %v133, %v217
    %v234 = vadd.f32 %v134, %v218
    %v235 = vadd.f32 %v135, %v219
    %v236 = vadd.f32 %v136, %v220
    %v237 = vadd.f32 %v137, %v221
    %v238 = vadd.f32 %v138, %v222
    %v239 = vadd.f32 %v139, %v223
    %v240 = vadd.f32 %v140, %v224
    %v241 = vadd.f32 %v141, %v225
    %v242 = vadd.f32 %v142, %v226
    %v243 = vadd.f32 %v143, %v227
    %v244 = vadd.f32 %v144, %v228
    %v245 = vadd.f32 %v145, %v229
    %v246 = vadd.f32 %v146, %v230
    %247 = vset.pattern.permute.xlu0 2
    %248 = vperm.xlu0 %247, %v31
    %v249 = vpop.permute.xlu0 %248
    %251 = vset.pattern.permute.xlu0 2
    %252 = vperm.xlu0 %251, %v32
    %v253 = vpop.permute.xlu0 %252
    %255 = vset.pattern.permute.xlu0 2
    %256 = vperm.xlu0 %255, %v33
    %v257 = vpop.permute.xlu0 %256
    %259 = vset.pattern.permute.xlu0 2
    %260 = vperm.xlu0 %259, %v34
    %v261 = vpop.permute.xlu0 %260
    %263 = vset.pattern.permute.xlu0 2
    %264 = vperm.xlu0 %263, %v35
    %v265 = vpop.permute.xlu0 %264
    %267 = vset.pattern.permute.xlu0 2
    %268 = vperm.xlu0 %267, %v36
    %v269 = vpop.permute.xlu0 %268
    %271 = vset.pattern.permute.xlu0 2
    %272 = vperm.xlu0 %271, %v37
    %v273 = vpop.permute.xlu0 %272
    %275 = vset.pattern.permute.xlu0 2
    %276 = vperm.xlu0 %275, %v38
    %v277 = vpop.permute.xlu0 %276
    %279 = vset.pattern.permute.xlu0 2
    %280 = vperm.xlu0 %279, %v39
    %v281 = vpop.permute.xlu0 %280
    %283 = vset.pattern.permute.xlu0 2
    %284 = vperm.xlu0 %283, %v40
    %v285 = vpop.permute.xlu0 %284
    %287 = vset.pattern.permute.xlu0 2
    %288 = vperm.xlu0 %287, %v41
    %v289 = vpop.permute.xlu0 %288
    %291 = vset.pattern.permute.xlu0 2
    %292 = vperm.xlu0 %291, %v42
    %v293 = vpop.permute.xlu0 %292
    %295 = vset.pattern.permute.xlu0 2
    %296 = vperm.xlu0 %295, %v43
    %v297 = vpop.permute.xlu0 %296
    %299 = vset.pattern.permute.xlu0 2
    %300 = vperm.xlu0 %299, %v44
    %v301 = vpop.permute.xlu0 %300
    %303 = vset.pattern.permute.xlu0 2
    %304 = vperm.xlu0 %303, %v45
    %v305 = vpop.permute.xlu0 %304
    %307 = vset.pattern.permute.xlu0 2
    %308 = vperm.xlu0 %307, %v46
    %v309 = vpop.permute.xlu0 %308
    %v311 = vlaneseq
    %v312 = vshrl.u32 %v311, 7
    %v313 = vsub.s32 2, %v312
    %v314 = vrot.slane %v30, %v313
    %v315 = vmul.f32 %v249, %v314
    %v316 = vmul.f32 %v253, %v314
    %v317 = vmul.f32 %v257, %v314
    %v318 = vmul.f32 %v261, %v314
    %v319 = vmul.f32 %v265, %v314
    %v320 = vmul.f32 %v269, %v314
    %v321 = vmul.f32 %v273, %v314
    %v322 = vmul.f32 %v277, %v314
    %v323 = vmul.f32 %v281, %v314
    %v324 = vmul.f32 %v285, %v314
    %v325 = vmul.f32 %v289, %v314
    %v326 = vmul.f32 %v293, %v314
    %v327 = vmul.f32 %v297, %v314
    %v328 = vmul.f32 %v301, %v314
    %v329 = vmul.f32 %v305, %v314
    %v330 = vmul.f32 %v309, %v314
    %v331 = vadd.f32 %v231, %v315
    %v332 = vadd.f32 %v232, %v316
    %v333 = vadd.f32 %v233, %v317
    %v334 = vadd.f32 %v234, %v318
    %v335 = vadd.f32 %v235, %v319
    %v336 = vadd.f32 %v236, %v320
    %v337 = vadd.f32 %v237, %v321
    %v338 = vadd.f32 %v238, %v322
    %v339 = vadd.f32 %v239, %v323
    %v340 = vadd.f32 %v240, %v324
    %v341 = vadd.f32 %v241, %v325
    %v342 = vadd.f32 %v242, %v326
    %v343 = vadd.f32 %v243, %v327
    %v344 = vadd.f32 %v244, %v328
    %v345 = vadd.f32 %v245, %v329
    %v346 = vadd.f32 %v246, %v330
    %347 = vset.pattern.permute.xlu0 3
    %348 = vperm.xlu0 %347, %v31
    %v349 = vpop.permute.xlu0 %348
    %351 = vset.pattern.permute.xlu0 3
    %352 = vperm.xlu0 %351, %v32
    %v353 = vpop.permute.xlu0 %352
    %355 = vset.pattern.permute.xlu0 3
    %356 = vperm.xlu0 %355, %v33
    %v357 = vpop.permute.xlu0 %356
    %359 = vset.pattern.permute.xlu0 3
    %360 = vperm.xlu0 %359, %v34
    %v361 = vpop.permute.xlu0 %360
    %363 = vset.pattern.permute.xlu0 3
    %364 = vperm.xlu0 %363, %v35
    %v365 = vpop.permute.xlu0 %364
    %367 = vset.pattern.permute.xlu0 3
    %368 = vperm.xlu0 %367, %v36
    %v369 = vpop.permute.xlu0 %368
    %371 = vset.pattern.permute.xlu0 3
    %372 = vperm.xlu0 %371, %v37
    %v373 = vpop.permute.xlu0 %372
    %375 = vset.pattern.permute.xlu0 3
    %376 = vperm.xlu0 %375, %v38
    %v377 = vpop.permute.xlu0 %376
    %379 = vset.pattern.permute.xlu0 3
    %380 = vperm.xlu0 %379, %v39
    %v381 = vpop.permute.xlu0 %380
    %383 = vset.pattern.permute.xlu0 3
    %384 = vperm.xlu0 %383, %v40
    %v385 = vpop.permute.xlu0 %384
    %387 = vset.pattern.permute.xlu0 3
    %388 = vperm.xlu0 %387, %v41
    %v389 = vpop.permute.xlu0 %388
    %391 = vset.pattern.permute.xlu0 3
    %392 = vperm.xlu0 %391, %v42
    %v393 = vpop.permute.xlu0 %392
    %395 = vset.pattern.permute.xlu0 3
    %396 = vperm.xlu0 %395, %v43
    %v397 = vpop.permute.xlu0 %396
    %399 = vset.pattern.permute.xlu0 3
    %400 = vperm.xlu0 %399, %v44
    %v401 = vpop.permute.xlu0 %400
    %403 = vset.pattern.permute.xlu0 3
    %404 = vperm.xlu0 %403, %v45
    %v405 = vpop.permute.xlu0 %404
    %407 = vset.pattern.permute.xlu0 3
    %408 = vperm.xlu0 %407, %v46
    %v409 = vpop.permute.xlu0 %408
    %v411 = vlaneseq
    %v412 = vshrl.u32 %v411, 7
    %v413 = vsub.s32 3, %v412
    %v414 = vrot.slane %v30, %v413
    %v415 = vmul.f32 %v349, %v414
    %v416 = vmul.f32 %v353, %v414
    %v417 = vmul.f32 %v357, %v414
    %v418 = vmul.f32 %v361, %v414
    %v419 = vmul.f32 %v365, %v414
    %v420 = vmul.f32 %v369, %v414
    %v421 = vmul.f32 %v373, %v414
    %v422 = vmul.f32 %v377, %v414
    %v423 = vmul.f32 %v381, %v414
    %v424 = vmul.f32 %v385, %v414
    %v425 = vmul.f32 %v389, %v414
    %v426 = vmul.f32 %v393, %v414
    %v427 = vmul.f32 %v397, %v414
    %v428 = vmul.f32 %v401, %v414
    %v429 = vmul.f32 %v405, %v414
    %v430 = vmul.f32 %v409, %v414
    %v431 = vadd.f32 %v331, %v415
    %v432 = vadd.f32 %v332, %v416
    %v433 = vadd.f32 %v333, %v417
    %v434 = vadd.f32 %v334, %v418
    %v435 = vadd.f32 %v335, %v419
    %v436 = vadd.f32 %v336, %v420
    %v437 = vadd.f32 %v337, %v421
    %v438 = vadd.f32 %v338, %v422
    %v439 = vadd.f32 %v339, %v423
    %v440 = vadd.f32 %v340, %v424
    %v441 = vadd.f32 %v341, %v425
    %v442 = vadd.f32 %v342, %v426
    %v443 = vadd.f32 %v343, %v427
    %v444 = vadd.f32 %v344, %v428
    %v445 = vadd.f32 %v345, %v429
    %v446 = vadd.f32 %v346, %v430
    %v447 = vld [vmem:[%s2] sm:$0xff]
    %v448 = vld [vmem:[%s2 + $0x8] sm:$0xff]
    %v449 = vld [vmem:[%s2 + $0x10] sm:$0xff]
    %v450 = vld [vmem:[%s2 + $0x18] sm:$0xff]
    %v451 = vld [vmem:[%s2 + $0x20] sm:$0xff]
    %v452 = vld [vmem:[%s2 + $0x28] sm:$0xff]
    %v453 = vld [vmem:[%s2 + $0x30] sm:$0xff]
    %v454 = vld [vmem:[%s2 + $0x38] sm:$0xff]
    %v455 = vld [vmem:[%s2 + $0x40] sm:$0xff]
    %v456 = vld [vmem:[%s2 + $0x48] sm:$0xff]
    %v457 = vld [vmem:[%s2 + $0x50] sm:$0xff]
    %v458 = vld [vmem:[%s2 + $0x58] sm:$0xff]
    %v459 = vld [vmem:[%s2 + $0x60] sm:$0xff]
    %v460 = vld [vmem:[%s2 + $0x68] sm:$0xff]
    %v461 = vld [vmem:[%s2 + $0x70] sm:$0xff]
    %v462 = vld [vmem:[%s2 + $0x78] sm:$0xff]
    %464 = vset.pattern.permute.xlu0 0
    %465 = vperm.xlu0 %464, %v447
    %v466 = vpop.permute.xlu0 %465
    %469 = vset.pattern.permute.xlu0 0
    %470 = vperm.xlu0 %469, %v448
    %v471 = vpop.permute.xlu0 %470
    %474 = vset.pattern.permute.xlu0 0
    %475 = vperm.xlu0 %474, %v449
    %v476 = vpop.permute.xlu0 %475
    %479 = vset.pattern.permute.xlu0 0
    %480 = vperm.xlu0 %479, %v450
    %v481 = vpop.permute.xlu0 %480
    %484 = vset.pattern.permute.xlu0 0
    %485 = vperm.xlu0 %484, %v451
    %v486 = vpop.permute.xlu0 %485
    %489 = vset.pattern.permute.xlu0 0
    %490 = vperm.xlu0 %489, %v452
    %v491 = vpop.permute.xlu0 %490
    %494 = vset.pattern.permute.xlu0 0
    %495 = vperm.xlu0 %494, %v453
    %v496 = vpop.permute.xlu0 %495
    %499 = vset.pattern.permute.xlu0 0
    %500 = vperm.xlu0 %499, %v454
    %v501 = vpop.permute.xlu0 %500
    %504 = vset.pattern.permute.xlu0 0
    %505 = vperm.xlu0 %504, %v455
    %v506 = vpop.permute.xlu0 %505
    %509 = vset.pattern.permute.xlu0 0
    %510 = vperm.xlu0 %509, %v456
    %v511 = vpop.permute.xlu0 %510
    %514 = vset.pattern.permute.xlu0 0
    %515 = vperm.xlu0 %514, %v457
    %v516 = vpop.permute.xlu0 %515
    %519 = vset.pattern.permute.xlu0 0
    %520 = vperm.xlu0 %519, %v458
    %v521 = vpop.permute.xlu0 %520
    %524 = vset.pattern.permute.xlu0 0
    %525 = vperm.xlu0 %524, %v459
    %v526 = vpop.permute.xlu0 %525
    %529 = vset.pattern.permute.xlu0 0
    %530 = vperm.xlu0 %529, %v460
    %v531 = vpop.permute.xlu0 %530
    %534 = vset.pattern.permute.xlu0 0
    %535 = vperm.xlu0 %534, %v461
    %v536 = vpop.permute.xlu0 %535
    %539 = vset.pattern.permute.xlu0 0
    %540 = vperm.xlu0 %539, %v462
    %v541 = vpop.permute.xlu0 %540
    %v543 = vadd.f32 %v431, %v466
    %v544 = vadd.f32 %v432, %v471
    %v545 = vadd.f32 %v433, %v476
    %v546 = vadd.f32 %v434, %v481
    %v547 = vadd.f32 %v435, %v486
    %v548 = vadd.f32 %v436, %v491
    %v549 = vadd.f32 %v437, %v496
    %v550 = vadd.f32 %v438, %v501
    %v551 = vadd.f32 %v439, %v506
    %v552 = vadd.f32 %v440, %v511
    %v553 = vadd.f32 %v441, %v516
    %v554 = vadd.f32 %v442, %v521
    %v555 = vadd.f32 %v443, %v526
    %v556 = vadd.f32 %v444, %v531
    %v557 = vadd.f32 %v445, %v536
    %v558 = vadd.f32 %v446, %v541
    %v559 = vmax.f32 %v543, 0.0
    %v560 = vmax.f32 %v544, 0.0
    %v561 = vmax.f32 %v545, 0.0
    %v562 = vmax.f32 %v546, 0.0
    %v563 = vmax.f32 %v547, 0.0
    %v564 = vmax.f32 %v548, 0.0
    %v565 = vmax.f32 %v549, 0.0
    %v566 = vmax.f32 %v550, 0.0
    %v567 = vmax.f32 %v551, 0.0
    %v568 = vmax.f32 %v552, 0.0
    %v569 = vmax.f32 %v553, 0.0
    %v570 = vmax.f32 %v554, 0.0
    %v571 = vmax.f32 %v555, 0.0
    %v572 = vmax.f32 %v556, 0.0
    %v573 = vmax.f32 %v557, 0.0
    %v574 = vmax.f32 %v558, 0.0
    %v575 = vld [vmem:[%s3] sm:$0xf]
    %v576 = vld [vmem:[%s3 + $0x4] sm:$0xf]
    %v577 = vld [vmem:[%s3 + $0x8] sm:$0xf]
    %v578 = vld [vmem:[%s3 + $0xc] sm:$0xf]
    %v579 = vld [vmem:[%s3 + $0x10] sm:$0xf]
    %v580 = vld [vmem:[%s3 + $0x14] sm:$0xf]
    %v581 = vld [vmem:[%s3 + $0x18] sm:$0xf]
    %v582 = vld [vmem:[%s3 + $0x1c] sm:$0xf]
    %v583 = vld [vmem:[%s3 + $0x20] sm:$0xf]
    %v584 = vld [vmem:[%s3 + $0x24] sm:$0xf]
    %v585 = vld [vmem:[%s3 + $0x28] sm:$0xf]
    %v586 = vld [vmem:[%s3 + $0x2c] sm:$0xf]
    %v587 = vld [vmem:[%s3 + $0x30] sm:$0xf]
    %v588 = vld [vmem:[%s3 + $0x34] sm:$0xf]
    %v589 = vld [vmem:[%s3 + $0x38] sm:$0xf]
    %v590 = vld [vmem:[%s3 + $0x3c] sm:$0xf]
    %v591 = vpack.c.bf16 %v560, %v559
    %v592 = vpack.c.bf16 %v562, %v561
    %v593 = vpack.c.bf16 %v564, %v563
    %v594 = vpack.c.bf16 %v566, %v565
    %v595 = vpack.c.bf16 %v568, %v567
    %v596 = vpack.c.bf16 %v570, %v569
    %v597 = vpack.c.bf16 %v572, %v571
    %v598 = vpack.c.bf16 %v574, %v573
    %v599 = vld [vmem:[%s4] sm:$0xff]
    %v600 = vld [vmem:[%s4 + $0x8] sm:$0xff]
    %v601 = vld [vmem:[%s4 + $0x10] sm:$0xff]
    %v602 = vld [vmem:[%s4 + $0x18] sm:$0xff]
    %v603 = vld [vmem:[%s4 + $0x20] sm:$0xff]
    %v604 = vld [vmem:[%s4 + $0x28] sm:$0xff]
    %v605 = vld [vmem:[%s4 + $0x30] sm:$0xff]
    %v606 = vld [vmem:[%s4 + $0x38] sm:$0xff]
    %v607 = vld [vmem:[%s4 + $0x40] sm:$0xff]
    %v608 = vld [vmem:[%s4 + $0x48] sm:$0xff]
    %v609 = vld [vmem:[%s4 + $0x50] sm:$0xff]
    %v610 = vld [vmem:[%s4 + $0x58] sm:$0xff]
    %v611 = vld [vmem:[%s4 + $0x60] sm:$0xff]
    %v612 = vld [vmem:[%s4 + $0x68] sm:$0xff]
    %v613 = vld [vmem:[%s4 + $0x70] sm:$0xff]
    %v614 = vld [vmem:[%s4 + $0x78] sm:$0xff]
    %616 = vset.pattern.permute.xlu0 0
    %617 = vperm.xlu0 %616, %v599
    %v618 = vpop.permute.xlu0 %617
    %621 = vset.pattern.permute.xlu0 0
    %622 = vperm.xlu0 %621, %v600
    %v623 = vpop.permute.xlu0 %622
    %626 = vset.pattern.permute.xlu0 0
    %627 = vperm.xlu0 %626, %v601
    %v628 = vpop.permute.xlu0 %627
    %631 = vset.pattern.permute.xlu0 0
    %632 = vperm.xlu0 %631, %v602
    %v633 = vpop.permute.xlu0 %632
    %636 = vset.pattern.permute.xlu0 0
    %637 = vperm.xlu0 %636, %v603
    %v638 = vpop.permute.xlu0 %637
    %641 = vset.pattern.permute.xlu0 0
    %642 = vperm.xlu0 %641, %v604
    %v643 = vpop.permute.xlu0 %642
    %646 = vset.pattern.permute.xlu0 0
    %647 = vperm.xlu0 %646, %v605
    %v648 = vpop.permute.xlu0 %647
    %651 = vset.pattern.permute.xlu0 0
    %652 = vperm.xlu0 %651, %v606
    %v653 = vpop.permute.xlu0 %652
    %656 = vset.pattern.permute.xlu0 0
    %657 = vperm.xlu0 %656, %v607
    %v658 = vpop.permute.xlu0 %657
    %661 = vset.pattern.permute.xlu0 0
    %662 = vperm.xlu0 %661, %v608
    %v663 = vpop.permute.xlu0 %662
    %666 = vset.pattern.permute.xlu0 0
    %667 = vperm.xlu0 %666, %v609
    %v668 = vpop.permute.xlu0 %667
    %671 = vset.pattern.permute.xlu0 0
    %672 = vperm.xlu0 %671, %v610
    %v673 = vpop.permute.xlu0 %672
    %676 = vset.pattern.permute.xlu0 0
    %677 = vperm.xlu0 %676, %v611
    %v678 = vpop.permute.xlu0 %677
    %681 = vset.pattern.permute.xlu0 0
    %682 = vperm.xlu0 %681, %v612
    %v683 = vpop.permute.xlu0 %682
    %686 = vset.pattern.permute.xlu0 0
    %687 = vperm.xlu0 %686, %v613
    %v688 = vpop.permute.xlu0 %687
    %691 = vset.pattern.permute.xlu0 0
    %692 = vperm.xlu0 %691, %v614
    %v693 = vpop.permute.xlu0 %692
    %v711 = vunpack.c.l.b16 %v575
    %v712 = vunpack.c.l.b16 %v576
    %v713 = vunpack.c.l.b16 %v577
    %v714 = vunpack.c.l.b16 %v578
    %v715 = vunpack.c.l.b16 %v579
    %v716 = vunpack.c.l.b16 %v580
    %v717 = vunpack.c.l.b16 %v581
    %v718 = vunpack.c.l.b16 %v582
    %v719 = vunpack.c.l.b16 %v583
    %v720 = vunpack.c.l.b16 %v584
    %v721 = vunpack.c.l.b16 %v585
    %v722 = vunpack.c.l.b16 %v586
    %v723 = vunpack.c.l.b16 %v587
    %v724 = vunpack.c.l.b16 %v588
    %v725 = vunpack.c.l.b16 %v589
    %v726 = vunpack.c.l.b16 %v590
    %v727 = vpack.c.b16 %v712, %v711
    %v728 = vpack.c.b16 %v714, %v713
    %v729 = vpack.c.b16 %v716, %v715
    %v730 = vpack.c.b16 %v718, %v717
    %v731 = vpack.c.b16 %v720, %v719
    %v732 = vpack.c.b16 %v722, %v721
    %v733 = vpack.c.b16 %v724, %v723
    %v734 = vpack.c.b16 %v726, %v725
    %743 = vmatprep.subr.bf16.mxu0 0
    %744 = vmatpush1.bf16.msra.mxu0 %v598
    %745 = vmatprep.subr.bf16.mxu0 0
    %746 = vmatpush1.bf16.msra.mxu0 %v597
    %747 = vmatprep.subr.bf16.mxu0 0
    %748 = vmatpush1.bf16.msra.mxu0 %v596
    %749 = vmatprep.subr.bf16.mxu0 0
    %750 = vmatpush1.bf16.msra.mxu0 %v595
    %751 = vmatprep.subr.bf16.mxu0 0
    %752 = vmatpush1.bf16.msra.mxu0 %v594
    %753 = vmatprep.subr.bf16.mxu0 0
    %754 = vmatpush1.bf16.msra.mxu0 %v593
    %755 = vmatprep.subr.bf16.mxu0 0
    %756 = vmatpush1.bf16.msra.mxu0 %v592
    %757 = vmatprep.subr.bf16.mxu0 0
    %758 = vmatpush1.bf16.msra.mxu0 %v591
    %759 = vmatprep.subr.bf16.mxu0 0
    %760 = vmatpush2.bf16.msra.mxu0 0
    %761 = vmatprep.subr.bf16.mxu0 0
    %762 = vmatpush2.bf16.msra.mxu0 0
    %763 = vmatprep.subr.bf16.mxu0 0
    %764 = vmatpush2.bf16.msra.mxu0 0
    %765 = vmatprep.subr.bf16.mxu0 0
    %766 = vmatpush2.bf16.msra.mxu0 0
    %767 = vmatprep.subr.bf16.mxu0 0
    %768 = vmatpush2.bf16.msra.mxu0 0
    %769 = vmatprep.subr.bf16.mxu0 0
    %770 = vmatpush2.bf16.msra.mxu0 0
    %771 = vmatprep.subr.bf16.mxu0 0
    %772 = vmatpush2.bf16.msra.mxu0 0
    %773 = vmatprep.subr.bf16.mxu0 0
    %774 = vmatpush2.bf16.msra.mxu0 0
    %775 = vmatprep.mubr.bf16.mxu0 0
    %776 = vmatmul.mubr.bf16.gmra.mxu0 %v727
    %v777 = vpop.f32.mrf.mxu0
    %v778 = vadd.f32 %v618, %v777
    %v779 = vpop.f32.mrf.mxu0
    %v780 = vpop.f32.mrf.mxu0
    %v781 = vadd.f32 %v623, %v780
    %v782 = vpop.f32.mrf.mxu0
    %783 = vmatprep.mubr.bf16.mxu0 0
    %784 = vmatmul.mubr.bf16.gmra.mxu0 %v728
    %v785 = vpop.f32.mrf.mxu0
    %v786 = vadd.f32 %v628, %v785
    %v787 = vpop.f32.mrf.mxu0
    %v788 = vpop.f32.mrf.mxu0
    %v789 = vadd.f32 %v633, %v788
    %v790 = vpop.f32.mrf.mxu0
    %791 = vmatprep.mubr.bf16.mxu0 0
    %792 = vmatmul.mubr.bf16.gmra.mxu0 %v729
    %v793 = vpop.f32.mrf.mxu0
    %v794 = vadd.f32 %v638, %v793
    %v795 = vpop.f32.mrf.mxu0
    %v796 = vpop.f32.mrf.mxu0
    %v797 = vadd.f32 %v643, %v796
    %v798 = vpop.f32.mrf.mxu0
    %799 = vmatprep.mubr.bf16.mxu0 0
    %800 = vmatmul.mubr.bf16.gmra.mxu0 %v730
    %v801 = vpop.f32.mrf.mxu0
    %v802 = vadd.f32 %v648, %v801
    %v803 = vpop.f32.mrf.mxu0
    %v804 = vpop.f32.mrf.mxu0
    %v805 = vadd.f32 %v653, %v804
    %v806 = vpop.f32.mrf.mxu0
    %807 = vmatprep.mubr.bf16.mxu0 0
    %808 = vmatmul.mubr.bf16.gmra.mxu0 %v731
    %v809 = vpop.f32.mrf.mxu0
    %v810 = vadd.f32 %v658, %v809
    %v811 = vpop.f32.mrf.mxu0
    %v812 = vpop.f32.mrf.mxu0
    %v813 = vadd.f32 %v663, %v812
    %v814 = vpop.f32.mrf.mxu0
    %815 = vmatprep.mubr.bf16.mxu0 0
    %816 = vmatmul.mubr.bf16.gmra.mxu0 %v732
    %v817 = vpop.f32.mrf.mxu0
    %v818 = vadd.f32 %v668, %v817
    %v819 = vpop.f32.mrf.mxu0
    %v820 = vpop.f32.mrf.mxu0
    %v821 = vadd.f32 %v673, %v820
    %v822 = vpop.f32.mrf.mxu0
    %823 = vmatprep.mubr.bf16.mxu0 0
    %824 = vmatmul.mubr.bf16.gmra.mxu0 %v733
    %v825 = vpop.f32.mrf.mxu0
    %v826 = vadd.f32 %v678, %v825
    %v827 = vpop.f32.mrf.mxu0
    %v828 = vpop.f32.mrf.mxu0
    %v829 = vadd.f32 %v683, %v828
    %v830 = vpop.f32.mrf.mxu0
    %831 = vmatprep.mubr.bf16.mxu0 0
    %832 = vmatmul.mubr.bf16.gmra.mxu0 %v734
    %v833 = vpop.f32.mrf.mxu0
    %v834 = vadd.f32 %v688, %v833
    %v835 = vpop.f32.mrf.mxu0
    %v836 = vpop.f32.mrf.mxu0
    %v837 = vadd.f32 %v693, %v836
    %v838 = vpop.f32.mrf.mxu0
    %839 = vdwg.mxu0
    %v840 = vmax.f32 %v778, 0.0
    %v841 = vmax.f32 %v781, 0.0
    %v842 = vmax.f32 %v786, 0.0
    %v843 = vmax.f32 %v789, 0.0
    %v844 = vmax.f32 %v794, 0.0
    %v845 = vmax.f32 %v797, 0.0
    %v846 = vmax.f32 %v802, 0.0
    %v847 = vmax.f32 %v805, 0.0
    %v848 = vmax.f32 %v810, 0.0
    %v849 = vmax.f32 %v813, 0.0
    %v850 = vmax.f32 %v818, 0.0
    %v851 = vmax.f32 %v821, 0.0
    %v852 = vmax.f32 %v826, 0.0
    %v853 = vmax.f32 %v829, 0.0
    %v854 = vmax.f32 %v834, 0.0
    %v855 = vmax.f32 %v837, 0.0
    %v856 = vld [vmem:[%s5] sm:$0xf]
    %v857 = vpack.c.bf16 %v841, %v840
    %v858 = vpack.c.bf16 %v843, %v842
    %v859 = vpack.c.bf16 %v845, %v844
    %v860 = vpack.c.bf16 %v847, %v846
    %v861 = vpack.c.bf16 %v849, %v848
    %v862 = vpack.c.bf16 %v851, %v850
    %v863 = vpack.c.bf16 %v853, %v852
    %v864 = vpack.c.bf16 %v855, %v854
    %865 = vmatprep.subr.bf16.mxu0 0
    %866 = vmatpush1.bf16.msra.mxu0 %v864
    %867 = vmatprep.subr.bf16.mxu0 0
    %868 = vmatpush1.bf16.msra.mxu0 %v863
    %869 = vmatprep.subr.bf16.mxu0 0
    %870 = vmatpush1.bf16.msra.mxu0 %v862
    %871 = vmatprep.subr.bf16.mxu0 0
    %872 = vmatpush1.bf16.msra.mxu0 %v861
    %873 = vmatprep.subr.bf16.mxu0 0
    %874 = vmatpush1.bf16.msra.mxu0 %v860
    %875 = vmatprep.subr.bf16.mxu0 0
    %876 = vmatpush1.bf16.msra.mxu0 %v859
    %877 = vmatprep.subr.bf16.mxu0 0
    %878 = vmatpush1.bf16.msra.mxu0 %v858
    %879 = vmatprep.subr.bf16.mxu0 0
    %880 = vmatpush1.bf16.msra.mxu0 %v857
    %881 = vmatprep.subr.bf16.mxu0 0
    %882 = vmatpush2.bf16.msra.mxu0 0
    %883 = vmatprep.subr.bf16.mxu0 0
    %884 = vmatpush2.bf16.msra.mxu0 0
    %885 = vmatprep.subr.bf16.mxu0 0
    %886 = vmatpush2.bf16.msra.mxu0 0
    %887 = vmatprep.subr.bf16.mxu0 0
    %888 = vmatpush2.bf16.msra.mxu0 0
    %889 = vmatprep.subr.bf16.mxu0 0
    %890 = vmatpush2.bf16.msra.mxu0 0
    %891 = vmatprep.subr.bf16.mxu0 0
    %892 = vmatpush2.bf16.msra.mxu0 0
    %893 = vmatprep.subr.bf16.mxu0 0
    %894 = vmatpush2.bf16.msra.mxu0 0
    %895 = vmatprep.subr.bf16.mxu0 0
    %896 = vmatpush2.bf16.msra.mxu0 0
    %897 = vmatprep.mubr.bf16.mxu0 0
    %898 = vmatmul.mubr.bf16.gmra.mxu0 %v856
    %v899 = vpop.f32.mrf.mxu0
    %v900 = vadd.f32 0.0, %v899
    %v901 = vpop.f32.mrf.mxu0
    %v902 = vpop.f32.mrf.mxu0
    %v903 = vpop.f32.mrf.mxu0
    %904 = vdwg.mxu0
    %v905 = vld [vmem:[#allocation2] sm:$0x1]
    %907 = vset.pattern.permute.xlu0 0
    %908 = vperm.xlu0 %907, %v905
    %v909 = vpop.permute.xlu0 %908
    %v911 = vlaneseq
    %v912 = vshrl.u32 %v911, 7
    %v913 = vsub.s32 0, %v912
    %v914 = vrot.slane %v909, %v913
    %v915 = vadd.f32 %v900, %v914
    %v916 = vsub.f32 0.0, %v915
    %v917 = vmul.f32 %v916, 1.442695
    %v918 = vpow.pop %v917
    %v919 = vadd.f32 %v918, 1.0
    %v920 = vrcp.pop %v919
    %921 = vst [vmem:[#allocation3 + $0x1] sm:$0x1] %v920
    %v922 = vsub.f32 1.0, %v920
    %923 = vst [vmem:[#allocation3] sm:$0x1] %v922
    // Predicated region
    $region30: #{actor_forward.1} parent=1 // pred_check
      _
    $region31: #{actor_forward.1} parent=1 // pred_check_branch
      %925 = sbr.rel (0) target = $region33
    $region32: #{actor_forward.1} parent=1 // pred_region
      %s927 = ssub.s32 32, 32
      %928 = vsyncadd [#allocation4], %s927
      %s930 = sshll.u32 [#allocation3], 4
      %s931 = int_to_ptr.vmem [resolvable:$true] %s930
      %933 = dma.vmem_to_hbm [thread:$0]  %s931, 32, %s7, [#allocation4]
    $region33: #{actor_forward.1} parent=1 // pred_fallthru
      _
    // Predicated region
    $region34: #{actor_forward.1} parent=1 // pred_check
      _
    $region35: #{actor_forward.1} parent=1 // pred_check_branch
      %935 = sbr.rel (0) target = $region37
    $region36: #{actor_forward.1} parent=1 // pred_region
      %936 = dma.done [#allocation4], 32
    $region37: #{actor_forward.1} parent=1 // pred_fallthru
      _
    %937 = vsyncpa [#allocation4], 1

</llo_original>
